<compile_context>
chip_gen: v6e
topology: v6e:2x2x1
jax: 0.10.0
libtpu: 0.0.40
codegen_flags: <defaults>
</compile_context>

<pallas_src>
import jax
import jax.numpy as jnp
from jax.experimental import pallas as pl
from jax.experimental.pallas import tpu as pltpu


def _make_kernel(B, Cin, L, K, Lout):
    """Kernel closure over the (small, static) problem dimensions."""
    IKL = Cin * K * Lout  # im2col columns (before the ones column)

    def kernel(x_ref, wc_ref, wf_ref, o_ref, patch_ref):
        # x_ref    : (B, Cin*L)            row-major flatten of (Cin, L)
        # wc_ref   : (IKL+1, Lout*Cout+1)  block-diag conv weight + bias row + passthrough col
        # wf_ref   : (Lout*Cout+1, O)      fc weight (flatten folded in) + fc-bias row
        # o_ref    : (B, O)                written exactly once
        # patch_ref: (B, IKL+1)            VMEM scratch for the im2col matrix
        x2 = x_ref[...]  # (B, Cin*L): one padded (8,128) vreg at these sizes

        # In-kernel im2col: column (i*K + k)*Lout + t  <-  x[b, i, t + k].
        # Cin*K static lane-slices + masked stores; no gather, no transpose.
        p = 0
        for i in range(Cin):
            for k in range(K):
                s = i * L + k
                patch_ref[:, p * Lout:(p + 1) * Lout] = x2[:, s:s + Lout]
                p += 1
        # Ones column: multiplies the conv-bias row of Wbig and rides the
        # passthrough column into the second matmul (folds the fc bias too).
        patch_ref[:, IKL:IKL + 1] = jnp.ones((B, 1), jnp.float32)

        patches = patch_ref[...]                                       # (B, IKL+1)

        # Conv + bias (+ passthrough) as ONE 2-D MXU matmul, then ReLU
        # (relu(1) == 1, so the passthrough column survives).
        h = jnp.dot(patches, wc_ref[...], preferred_element_type=jnp.float32)
        h = jnp.maximum(h, 0.0)                                        # (B, Lout*Cout+1)

        # FC (+ bias via passthrough) as ONE 2-D MXU matmul; single store.
        o_ref[...] = jnp.dot(h, wf_ref[...], preferred_element_type=jnp.float32)

    return kernel


def _prepare_weights(conv_w, conv_b, fc_w, fc_b, L):
    """One-time (per parameter set) re-layout of the PyTorch parameters."""
    Cout, Cin, K = conv_w.shape
    O = fc_w.shape[0]
    Lout = L - K + 1
    IK = Cin * K
    IKL = IK * Lout
    LC = Lout * Cout

    # Conv weight with rows ordered i*K + k.
    wconv = conv_w.transpose(1, 2, 0).reshape(IK, Cout)               # [i*K+k, c]
    # Block-diagonal over t: wbig[(i*K+k)*Lout + tr, tc*Cout + c] = wconv * (tr == tc).
    eye = jnp.eye(Lout, dtype=jnp.float32)
    wbig = jnp.einsum('rc,uv->ruvc', wconv, eye).reshape(IKL, LC)
    bconv_flat = jnp.tile(conv_b, Lout)                               # [t*Cout + c] = conv_b[c]

    # Augment: last row = conv bias, last column = ones passthrough.
    wbig_aug = jnp.zeros((IKL + 1, LC + 1), jnp.float32)
    wbig_aug = wbig_aug.at[:IKL, :LC].set(wbig)
    wbig_aug = wbig_aug.at[IKL, :LC].set(bconv_flat)
    wbig_aug = wbig_aug.at[IKL, LC].set(1.0)

    # PyTorch flattens conv output as c*Lout + t; our h columns are t*Cout + c.
    wfc = fc_w.reshape(O, Cout, Lout).transpose(2, 1, 0).reshape(LC, O)
    wfc_aug = jnp.concatenate([wfc, fc_b[None, :]], axis=0)           # last row = fc bias

    return wbig_aug, wfc_aug


def cnn1d_to_linear(x, conv_w, conv_b, fc_w, fc_b):
    B, Cin, L = x.shape
    Cout, _, K = conv_w.shape
    O = fc_w.shape[0]
    Lout = L - K + 1
    IKL = Cin * K * Lout

    wbig_aug, wfc_aug = _prepare_weights(conv_w, conv_b, fc_w, fc_b, L)
    x2 = x.reshape(B, Cin * L)          # contiguous reshape -> no data movement

    kernel = _make_kernel(B, Cin, L, K, Lout)
    vmem = pltpu.MemorySpace.VMEM
    out = pl.pallas_call(
        kernel,
        out_shape=jax.ShapeDtypeStruct((B, O), jnp.float32),
        in_specs=[pl.BlockSpec(memory_space=vmem)] * 3,
        out_specs=pl.BlockSpec(memory_space=vmem),
        scratch_shapes=[pltpu.VMEM((B, IKL + 1), jnp.float32)],
    )(x2, wbig_aug, wfc_aug)
    return out


def reference(x, conv_w, conv_b, fc_w, fc_b):
    conv = jax.lax.conv_general_dilated(
        x, conv_w, window_strides=(1,), padding="VALID",
        dimension_numbers=("NCH", "OIH", "NCH"))
    conv = jax.nn.relu(conv + conv_b[None, :, None])
    flat = conv.reshape(x.shape[0], -1)
    return flat @ fc_w.T + fc_b


if __name__ == "__main__":
    # module hyper-params: out_channel_num=8, kernel_len=3, linear_out_len=32, nt_len=16
    B, Cin, L = 2, 4, 16
    Cout, K, O = 8, 3, 32
    conv_output_size = Cout * (L - K + 1)

    key = jax.random.PRNGKey(0)
    kx, kw1, kb1, kw2, kb2 = jax.random.split(key, 5)
    x = jax.random.normal(kx, (B, Cin, L), jnp.float32)
    conv_w = 0.2 * jax.random.normal(kw1, (Cout, Cin, K), jnp.float32)
    conv_b = 0.1 * jax.random.normal(kb1, (Cout,), jnp.float32)
    fc_w = 0.1 * jax.random.normal(kw2, (O, conv_output_size), jnp.float32)
    fc_b = 0.1 * jax.random.normal(kb2, (O,), jnp.float32)

    out = jax.block_until_ready(cnn1d_to_linear(x, conv_w, conv_b, fc_w, fc_b))

    ref = reference(x, conv_w, conv_b, fc_w, fc_b)
    assert out.shape == (B, O)
    assert jnp.allclose(out, ref, atol=1e-4, rtol=1e-4), float(jnp.max(jnp.abs(out - ref)))
    print("KERNEL_OK")
</pallas_src>

<mosaic_0001>
module attributes {stable_mosaic.version = 11 : i64} {
  func.func @kernel(%arg0: memref<2x64xf32, #tpu.memory_space<vmem>>, %arg1: memref<169x113xf32, #tpu.memory_space<vmem>>, %arg2: memref<113x32xf32, #tpu.memory_space<vmem>>, %arg3: memref<2x32xf32, #tpu.memory_space<vmem>>, %arg4: memref<2x169xf32, #tpu.memory_space<vmem>>) attributes {dimension_semantics = [], scalar_prefetch = 0 : i64, scratch_operands = 1 : i64, tpu.core_type = #tpu.core_type<tc>} {
    %c0 = arith.constant 0 : index
    %c0_0 = arith.constant 0 : index
    %0 = vector.load %arg0[%c0, %c0_0] : memref<2x64xf32, #tpu.memory_space<vmem>>, vector<2x64xf32>
    %1 = vector.extract_strided_slice %0 {offsets = [0, 0], sizes = [2, 14], strides = [1, 1]} : vector<2x64xf32> to vector<2x14xf32>
    %c0_1 = arith.constant 0 : index
    %c0_2 = arith.constant 0 : index
    %2 = vector.load %arg4[%c0_1, %c0_2] : memref<2x169xf32, #tpu.memory_space<vmem>>, vector<2x14xf32>
    tpu.vector_store %arg4[%c0_1, %c0_2], %1 {strides = array<i32>} : memref<2x169xf32, #tpu.memory_space<vmem>>, vector<2x14xf32>,
    %3 = vector.extract_strided_slice %0 {offsets = [0, 1], sizes = [2, 14], strides = [1, 1]} : vector<2x64xf32> to vector<2x14xf32>
    %c0_3 = arith.constant 0 : index
    %c14 = arith.constant 14 : index
    %4 = vector.load %arg4[%c0_3, %c14] : memref<2x169xf32, #tpu.memory_space<vmem>>, vector<2x14xf32>
    tpu.vector_store %arg4[%c0_3, %c14], %3 {strides = array<i32>} : memref<2x169xf32, #tpu.memory_space<vmem>>, vector<2x14xf32>,
    %5 = vector.extract_strided_slice %0 {offsets = [0, 2], sizes = [2, 14], strides = [1, 1]} : vector<2x64xf32> to vector<2x14xf32>
    %c0_4 = arith.constant 0 : index
    %c28 = arith.constant 28 : index
    %6 = vector.load %arg4[%c0_4, %c28] : memref<2x169xf32, #tpu.memory_space<vmem>>, vector<2x14xf32>
    tpu.vector_store %arg4[%c0_4, %c28], %5 {strides = array<i32>} : memref<2x169xf32, #tpu.memory_space<vmem>>, vector<2x14xf32>,
    %7 = vector.extract_strided_slice %0 {offsets = [0, 16], sizes = [2, 14], strides = [1, 1]} : vector<2x64xf32> to vector<2x14xf32>
    %c0_5 = arith.constant 0 : index
    %c42 = arith.constant 42 : index
    %8 = vector.load %arg4[%c0_5, %c42] : memref<2x169xf32, #tpu.memory_space<vmem>>, vector<2x14xf32>
    tpu.vector_store %arg4[%c0_5, %c42], %7 {strides = array<i32>} : memref<2x169xf32, #tpu.memory_space<vmem>>, vector<2x14xf32>,
    %9 = vector.extract_strided_slice %0 {offsets = [0, 17], sizes = [2, 14], strides = [1, 1]} : vector<2x64xf32> to vector<2x14xf32>
    %c0_6 = arith.constant 0 : index
    %c56 = arith.constant 56 : index
    %10 = vector.load %arg4[%c0_6, %c56] : memref<2x169xf32, #tpu.memory_space<vmem>>, vector<2x14xf32>
    tpu.vector_store %arg4[%c0_6, %c56], %9 {strides = array<i32>} : memref<2x169xf32, #tpu.memory_space<vmem>>, vector<2x14xf32>,
    %11 = vector.extract_strided_slice %0 {offsets = [0, 18], sizes = [2, 14], strides = [1, 1]} : vector<2x64xf32> to vector<2x14xf32>
    %c0_7 = arith.constant 0 : index
    %c70 = arith.constant 70 : index
    %12 = vector.load %arg4[%c0_7, %c70] : memref<2x169xf32, #tpu.memory_space<vmem>>, vector<2x14xf32>
    tpu.vector_store %arg4[%c0_7, %c70], %11 {strides = array<i32>} : memref<2x169xf32, #tpu.memory_space<vmem>>, vector<2x14xf32>,
    %13 = vector.extract_strided_slice %0 {offsets = [0, 32], sizes = [2, 14], strides = [1, 1]} : vector<2x64xf32> to vector<2x14xf32>
    %c0_8 = arith.constant 0 : index
    %c84 = arith.constant 84 : index
    %14 = vector.load %arg4[%c0_8, %c84] : memref<2x169xf32, #tpu.memory_space<vmem>>, vector<2x14xf32>
    tpu.vector_store %arg4[%c0_8, %c84], %13 {strides = array<i32>} : memref<2x169xf32, #tpu.memory_space<vmem>>, vector<2x14xf32>,
    %15 = vector.extract_strided_slice %0 {offsets = [0, 33], sizes = [2, 14], strides = [1, 1]} : vector<2x64xf32> to vector<2x14xf32>
    %c0_9 = arith.constant 0 : index
    %c98 = arith.constant 98 : index
    %16 = vector.load %arg4[%c0_9, %c98] : memref<2x169xf32, #tpu.memory_space<vmem>>, vector<2x14xf32>
    tpu.vector_store %arg4[%c0_9, %c98], %15 {strides = array<i32>} : memref<2x169xf32, #tpu.memory_space<vmem>>, vector<2x14xf32>,
    %17 = vector.extract_strided_slice %0 {offsets = [0, 34], sizes = [2, 14], strides = [1, 1]} : vector<2x64xf32> to vector<2x14xf32>
    %c0_10 = arith.constant 0 : index
    %c112 = arith.constant 112 : index
    %18 = vector.load %arg4[%c0_10, %c112] : memref<2x169xf32, #tpu.memory_space<vmem>>, vector<2x14xf32>
    tpu.vector_store %arg4[%c0_10, %c112], %17 {strides = array<i32>} : memref<2x169xf32, #tpu.memory_space<vmem>>, vector<2x14xf32>,
    %19 = vector.extract_strided_slice %0 {offsets = [0, 48], sizes = [2, 14], strides = [1, 1]} : vector<2x64xf32> to vector<2x14xf32>
    %c0_11 = arith.constant 0 : index
    %c126 = arith.constant 126 : index
    %20 = vector.load %arg4[%c0_11, %c126] : memref<2x169xf32, #tpu.memory_space<vmem>>, vector<2x14xf32>
    tpu.vector_store %arg4[%c0_11, %c126], %19 {strides = array<i32>} : memref<2x169xf32, #tpu.memory_space<vmem>>, vector<2x14xf32>,
    %21 = vector.extract_strided_slice %0 {offsets = [0, 49], sizes = [2, 14], strides = [1, 1]} : vector<2x64xf32> to vector<2x14xf32>
    %c0_12 = arith.constant 0 : index
    %c140 = arith.constant 140 : index
    %22 = vector.load %arg4[%c0_12, %c140] : memref<2x169xf32, #tpu.memory_space<vmem>>, vector<2x14xf32>
    tpu.vector_store %arg4[%c0_12, %c140], %21 {strides = array<i32>} : memref<2x169xf32, #tpu.memory_space<vmem>>, vector<2x14xf32>,
    %23 = vector.extract_strided_slice %0 {offsets = [0, 50], sizes = [2, 14], strides = [1, 1]} : vector<2x64xf32> to vector<2x14xf32>
    %c0_13 = arith.constant 0 : index
    %c154 = arith.constant 154 : index
    %24 = vector.load %arg4[%c0_13, %c154] : memref<2x169xf32, #tpu.memory_space<vmem>>, vector<2x14xf32>
    tpu.vector_store %arg4[%c0_13, %c154], %23 {strides = array<i32>} : memref<2x169xf32, #tpu.memory_space<vmem>>, vector<2x14xf32>,
    %cst = arith.constant 1.000000e+00 : f32
    %25 = vector.broadcast %cst : f32 to vector<2x1xf32>
    %c0_14 = arith.constant 0 : index
    %c168 = arith.constant 168 : index
    %26 = vector.load %arg4[%c0_14, %c168] : memref<2x169xf32, #tpu.memory_space<vmem>>, vector<2x1xf32>
    tpu.vector_store %arg4[%c0_14, %c168], %25 {strides = array<i32>} : memref<2x169xf32, #tpu.memory_space<vmem>>, vector<2x1xf32>,
    %c0_15 = arith.constant 0 : index
    %c0_16 = arith.constant 0 : index
    %27 = vector.load %arg4[%c0_15, %c0_16] : memref<2x169xf32, #tpu.memory_space<vmem>>, vector<2x169xf32>
    %c0_17 = arith.constant 0 : index
    %c0_18 = arith.constant 0 : index
    %28 = vector.load %arg1[%c0_17, %c0_18] : memref<169x113xf32, #tpu.memory_space<vmem>>, vector<169x113xf32>
    %cst_19 = arith.constant dense<0.000000e+00> : vector<2x113xf32>
    %29 = tpu.matmul %27, %28, %cst_19 {dimension_numbers = #tpu.dot_dimension_numbers<[1], [0], [0], [1], [0, 0, 1, 1], [], []>} : vector<2x169xf32>, vector<169x113xf32>, vector<2x113xf32> -> vector<2x113xf32>
    %cst_20 = arith.constant 0.000000e+00 : f32
    %30 = vector.broadcast %cst_20 : f32 to vector<2x113xf32>
    %31 = arith.maximumf %29, %30 : vector<2x113xf32>
    %c0_21 = arith.constant 0 : index
    %c0_22 = arith.constant 0 : index
    %32 = vector.load %arg2[%c0_21, %c0_22] : memref<113x32xf32, #tpu.memory_space<vmem>>, vector<113x32xf32>
    %cst_23 = arith.constant dense<0.000000e+00> : vector<2x32xf32>
    %33 = tpu.matmul %31, %32, %cst_23 {dimension_numbers = #tpu.dot_dimension_numbers<[1], [0], [0], [1], [0, 0, 1, 1], [], []>} : vector<2x113xf32>, vector<113x32xf32>, vector<2x32xf32> -> vector<2x32xf32>
    %c0_24 = arith.constant 0 : index
    %c0_25 = arith.constant 0 : index
    %34 = vector.load %arg3[%c0_24, %c0_25] : memref<2x32xf32, #tpu.memory_space<vmem>>, vector<2x32xf32>
    tpu.vector_store %arg3[%c0_24, %c0_25], %33 {strides = array<i32>} : memref<2x32xf32, #tpu.memory_space<vmem>>, vector<2x32xf32>,
    return
  }
}

</mosaic_0001>

<llo_original>
// kernel: tpu_custom_call.1
$region0: #{tpu_custom_call.1}
  #allocation0 [shape = 'u32[]', space=smem, size = 0x4, offset = 0x4, fixed_abs, tag = 'smem constant byte address 0x4 - core index']
  #allocation1 [shape = 'u32[144,128]{1,0:T(1,128)}', space=vmem, size = 0x12000, scoped, tag = 'internal scratch']
  #allocation2 [shape = 'f32[2,169]{1,0:T(2,128)}', space=vmem, size = 0x800, scoped, tag = 'scratch operand']
  %s0 = inlined_call_operand.vmem [shape: f32[2,64], index: 0, kind: input, shape index: {}]
  %s1 = inlined_call_operand.hbm [shape: f32[169,113], index: 1, kind: input, shape index: {}]
  %s2 = inlined_call_operand.vmem [shape: f32[113,32], index: 2, kind: input, shape index: {}]
  %s3 = inlined_call_operand.hbm [shape: f32[2,32], index: 3, kind: output, shape index: {}]
  %s4 = sld [smem:[#allocation0]]
  $region26: #{tpu_custom_call.1} parent=0
    _
  %s6 = ssub.s32 1, %s4
  %s7 = scalar_select 0, %s6, %s4
  $region1: #{tpu_custom_call.1} parent=0
    #allocation3 [shape = 'u8[90112]{0}', space=vmem, size = 0x16000, scoped, tag = 'input window, operand 1, single buffered']
    #allocation4 [shape = 's32[1]{0}', space=sflag, size = 0x4, scoped, tag = 'scoped memory for tpu_custom_call.1']
    #allocation5 [shape = 's32[1]{0}', space=sflag, size = 0x4, scoped, tag = 'scoped memory for tpu_custom_call.1']
    #allocation6 [shape = 'u8[1024]{0}', space=vmem, size = 0x400, scoped, tag = 'output window, operand 0, single buffered']
    %8 = vsyncpa [#allocation4], 0
    %9 = vsyncpa [#allocation5], 0
    // Predicated region
    $region2: #{tpu_custom_call.1} parent=1 // pred_check
      _
    $region3: #{tpu_custom_call.1} parent=1 // pred_check_branch
      %11 = sbr.rel (0) target = $region5
    $region4: #{tpu_custom_call.1} parent=1 // pred_region
      _
    $region5: #{tpu_custom_call.1} parent=1 // pred_fallthru
      _
    // Predicated region
    $region6: #{tpu_custom_call.1} parent=1 // pred_check
      _
    $region7: #{tpu_custom_call.1} parent=1 // pred_check_branch
      %13 = sbr.rel (0) target = $region9
    $region8: #{tpu_custom_call.1} parent=1 // pred_region
      %s15 = ssub.s32 2816, 2816
      %16 = vsyncadd [#allocation4], %s15
      %s17 = sshll.u32 [#allocation3], 4
      %s18 = int_to_ptr.vmem [resolvable:$true] %s17
      %23 = dma.hbm_to_vmem [thread:$0]  %s1, 2816, %s18, [#allocation4], 128, 128, 8
    $region9: #{tpu_custom_call.1} parent=1 // pred_fallthru
      _
    // Predicated region
    $region10: #{tpu_custom_call.1} parent=1 // pred_check
      _
    $region11: #{tpu_custom_call.1} parent=1 // pred_check_branch
      %25 = sbr.rel (0) target = $region13
    $region12: #{tpu_custom_call.1} parent=1 // pred_region
      _
    $region13: #{tpu_custom_call.1} parent=1 // pred_fallthru
      _
    // Predicated region
    $region14: #{tpu_custom_call.1} parent=1 // pred_check
      _
    $region15: #{tpu_custom_call.1} parent=1 // pred_check_branch
      %27 = sbr.rel (0) target = $region17
    $region16: #{tpu_custom_call.1} parent=1 // pred_region
      %28 = dma.done [#allocation4], 2816
    $region17: #{tpu_custom_call.1} parent=1 // pred_fallthru
      _
    %v29 = vld [vmem:[%s0] sm:$0x3]
    %vm30 = vcmask 107520
    %31 = vst.msk [vmem:[#allocation2] sm:$0x3] %vm30, %v29
    %v34 = vunpack.c.l.s4 1983009808
    %v35 = vunpack.c.0.s8 %v34
    %v36 = vlaneseq
    %v37 = vshrl.u32 %v36, 7
    %v38 = vsub.s32 %v35, %v37
    %v39 = vrot.slane %v29, %v38
    %40 = vrot.lane.b32.xlu0 %v39, 13
    %v41 = vpop.permute.xlu0 %40
    %vm43 = vcmask 222320
    %44 = vst.msk [vmem:[#allocation2] sm:$0x3] %vm43, %v41
    %45 = vrot.lane.b32.xlu0 %v39, 26
    %v46 = vpop.permute.xlu0 %45
    %vm48 = vcmask 337120
    %49 = vst.msk [vmem:[#allocation2] sm:$0x3] %vm48, %v46
    %vm50 = vcmask 451920
    %51 = vst.msk [vmem:[#allocation2] sm:$0x3] %vm50, %v46
    %52 = vrot.lane.b32.xlu0 %v39, 39
    %v53 = vpop.permute.xlu0 %52
    %vm55 = vcmask 566720
    %56 = vst.msk [vmem:[#allocation2] sm:$0x3] %vm55, %v53
    %57 = vrot.lane.b32.xlu0 %v39, 52
    %v58 = vpop.permute.xlu0 %57
    %vm60 = vcmask 681520
    %61 = vst.msk [vmem:[#allocation2] sm:$0x3] %vm60, %v58
    %vm62 = vcmask 796320
    %63 = vst.msk [vmem:[#allocation2] sm:$0x3] %vm62, %v58
    %64 = vrot.lane.b32.xlu0 %v39, 65
    %v65 = vpop.permute.xlu0 %64
    %vm67 = vcmask 911120
    %68 = vst.msk [vmem:[#allocation2] sm:$0x3] %vm67, %v65
    %69 = vrot.lane.b32.xlu0 %v39, 78
    %v70 = vpop.permute.xlu0 %69
    %vm72 = vcmask 1025920
    %73 = vst.msk [vmem:[#allocation2] sm:$0x3] %vm72, %v70
    %v74 = vrot.slane %v70, 6
    %vm75 = vcmask 637952
    %v76 = vsel %vm75, %v74, %v70
    %vm78 = vcmask 1042416
    %vm79 = vcmask 93186
    %vm80 = vmor %vm79, %vm78
    %81 = vst.msk [vmem:[#allocation2] sm:$0xf] %vm80, %v76
    %82 = vrot.lane.b32.xlu0 %v39, 91
    %v83 = vpop.permute.xlu0 %82
    %vm85 = vcmask 205920
    %86 = vst.msk [vmem:[#allocation2 + $0x2] sm:$0x3] %vm85, %v83
    %87 = vrot.lane.b32.xlu0 %v39, 104
    %v88 = vpop.permute.xlu0 %87
    %vm90 = vcmask 320720
    %91 = vst.msk [vmem:[#allocation2 + $0x2] sm:$0x3] %vm90, %v88
    %vm92 = vcmask 329024
    %93 = vst.msk [vmem:[#allocation2 + $0x2] sm:$0x3] %vm92, 1.0
    %v94 = vld [vmem:[#allocation2] sm:$0xf]
    %v95 = vld [vmem:[#allocation3] sm:$0xff]
    %v96 = vld [vmem:[#allocation3 + $0x8] sm:$0xff]
    %v97 = vld [vmem:[#allocation3 + $0x10] sm:$0xff]
    %v98 = vld [vmem:[#allocation3 + $0x18] sm:$0xff]
    %v99 = vld [vmem:[#allocation3 + $0x20] sm:$0xff]
    %v100 = vld [vmem:[#allocation3 + $0x28] sm:$0xff]
    %v101 = vld [vmem:[#allocation3 + $0x30] sm:$0xff]
    %v102 = vld [vmem:[#allocation3 + $0x38] sm:$0xff]
    %v103 = vld [vmem:[#allocation3 + $0x40] sm:$0xff]
    %v104 = vld [vmem:[#allocation3 + $0x48] sm:$0xff]
    %v105 = vld [vmem:[#allocation3 + $0x50] sm:$0xff]
    %v106 = vld [vmem:[#allocation3 + $0x58] sm:$0xff]
    %v107 = vld [vmem:[#allocation3 + $0x60] sm:$0xff]
    %v108 = vld [vmem:[#allocation3 + $0x68] sm:$0xff]
    %v109 = vld [vmem:[#allocation3 + $0x70] sm:$0xff]
    %v110 = vld [vmem:[#allocation3 + $0x78] sm:$0xff]
    %v111 = vld [vmem:[#allocation3 + $0x80] sm:$0xff]
    %v112 = vld [vmem:[#allocation3 + $0x88] sm:$0xff]
    %v113 = vld [vmem:[#allocation3 + $0x90] sm:$0xff]
    %v114 = vld [vmem:[#allocation3 + $0x98] sm:$0xff]
    %v115 = vld [vmem:[#allocation3 + $0xa0] sm:$0xff]
    %v116 = vld [vmem:[#allocation3 + $0xa8] sm:$0x1]
    %v119 = vunpack.c.l.s4 1983009808
    %v120 = vunpack.c.0.s8 %v119
    %v121 = vlaneseq
    %v122 = vshrl.u32 %v121, 7
    %v123 = vsub.s32 %v120, %v122
    %v124 = vrot.slane %v94, %v123
    %v125 = vcombine.high %v124, %v124
    %vm127 = vcmask 334848
    %v128 = vsel %vm127, %v125, 0
    %vm130 = vcmask 1040384
    %v132 = vsel %vm130, %v116, 0
    %134 = vmatprep.subr.mxu0 0.0
    %135 = vmatpush1.msra.mxu0 %v110
    %136 = vmatprep.subr.mxu0 0.0
    %137 = vmatpush1.msra.mxu0 %v109
    %138 = vmatprep.subr.mxu0 0.0
    %139 = vmatpush1.msra.mxu0 %v108
    %140 = vmatprep.subr.mxu0 0.0
    %141 = vmatpush1.msra.mxu0 %v107
    %142 = vmatprep.subr.mxu0 0.0
    %143 = vmatpush1.msra.mxu0 %v106
    %144 = vmatprep.subr.mxu0 0.0
    %145 = vmatpush1.msra.mxu0 %v105
    %146 = vmatprep.subr.mxu0 0.0
    %147 = vmatpush1.msra.mxu0 %v104
    %148 = vmatprep.subr.mxu0 0.0
    %149 = vmatpush1.msra.mxu0 %v103
    %150 = vmatprep.subr.mxu0 0.0
    %151 = vmatpush1.msra.mxu0 %v102
    %152 = vmatprep.subr.mxu0 0.0
    %153 = vmatpush1.msra.mxu0 %v101
    %154 = vmatprep.subr.mxu0 0.0
    %155 = vmatpush1.msra.mxu0 %v100
    %156 = vmatprep.subr.mxu0 0.0
    %157 = vmatpush1.msra.mxu0 %v99
    %158 = vmatprep.subr.mxu0 0.0
    %159 = vmatpush1.msra.mxu0 %v98
    %160 = vmatprep.subr.mxu0 0.0
    %161 = vmatpush1.msra.mxu0 %v97
    %162 = vmatprep.subr.mxu0 0.0
    %163 = vmatpush1.msra.mxu0 %v96
    %164 = vmatprep.subr.mxu0 0.0
    %165 = vmatpush1.msra.mxu0 %v95
    %166 = vmatprep.subr.mxu0 0.0
    %167 = vmatpush2.msra.mxu0 0.0
    %168 = vmatprep.subr.mxu0 0.0
    %169 = vmatpush2.msra.mxu0 0.0
    %170 = vmatprep.subr.mxu0 0.0
    %171 = vmatpush2.msra.mxu0 0.0
    %172 = vmatprep.subr.mxu0 0.0
    %173 = vmatpush2.msra.mxu0 0.0
    %174 = vmatprep.subr.mxu0 0.0
    %175 = vmatpush2.msra.mxu0 0.0
    %176 = vmatprep.subr.mxu0 0.0
    %177 = vmatpush2.msra.mxu0 0.0
    %178 = vmatprep.subr.mxu0 0.0
    %179 = vmatpush2.msra.mxu0 0.0
    %180 = vmatprep.subr.mxu0 0.0
    %181 = vmatpush2.msra.mxu0 0.0
    %182 = vmatprep.subr.mxu0 0.0
    %183 = vmatpush2.msra.mxu0 0.0
    %184 = vmatprep.subr.mxu0 0.0
    %185 = vmatpush2.msra.mxu0 0.0
    %186 = vmatprep.subr.mxu0 0.0
    %187 = vmatpush2.msra.mxu0 %v132
    %188 = vmatprep.subr.mxu0 0.0
    %189 = vmatpush2.msra.mxu0 %v115
    %190 = vmatprep.subr.mxu0 0.0
    %191 = vmatpush2.msra.mxu0 %v114
    %192 = vmatprep.subr.mxu0 0.0
    %193 = vmatpush2.msra.mxu0 %v113
    %194 = vmatprep.subr.mxu0 0.0
    %195 = vmatpush2.msra.mxu0 %v112
    %196 = vmatprep.subr.mxu0 0.0
    %197 = vmatpush2.msra.mxu0 %v111
    %198 = vmatprep.mubr.f32.mxu0 %v128
    %199 = vmatmul.mubr.f32.gmra.mxu0 %v124
    %v200 = vpop.f32.mrf.mxu0
    %v201 = vadd.f32 0.0, %v200
    %v202 = vpop.f32.mrf.mxu0
    %203 = vdwg.mxu0
    %v204 = vmax.f32 %v201, 0.0
    %v205 = vld [vmem:[%s2] sm:$0xff]
    %v206 = vld [vmem:[%s2 + $0x8] sm:$0xff]
    %v207 = vld [vmem:[%s2 + $0x10] sm:$0xff]
    %v208 = vld [vmem:[%s2 + $0x18] sm:$0xff]
    %v209 = vld [vmem:[%s2 + $0x20] sm:$0xff]
    %v210 = vld [vmem:[%s2 + $0x28] sm:$0xff]
    %v211 = vld [vmem:[%s2 + $0x30] sm:$0xff]
    %v212 = vld [vmem:[%s2 + $0x38] sm:$0xff]
    %v213 = vld [vmem:[%s2 + $0x40] sm:$0xff]
    %v214 = vld [vmem:[%s2 + $0x48] sm:$0xff]
    %v215 = vld [vmem:[%s2 + $0x50] sm:$0xff]
    %v216 = vld [vmem:[%s2 + $0x58] sm:$0xff]
    %v217 = vld [vmem:[%s2 + $0x60] sm:$0xff]
    %v218 = vld [vmem:[%s2 + $0x68] sm:$0xff]
    %v219 = vld [vmem:[%s2 + $0x70] sm:$0x1]
    %vm220 = vcmask 924672
    %v222 = vsel %vm220, %v204, 0
    %v225 = vsel %vm130, %v219, 0
    %227 = vmatprep.subr.mxu0 0.0
    %228 = vmatpush1.msra.mxu0 0.0
    %229 = vmatprep.subr.mxu0 0.0
    %230 = vmatpush1.msra.mxu0 %v225
    %231 = vmatprep.subr.mxu0 0.0
    %232 = vmatpush1.msra.mxu0 %v218
    %233 = vmatprep.subr.mxu0 0.0
    %234 = vmatpush1.msra.mxu0 %v217
    %235 = vmatprep.subr.mxu0 0.0
    %236 = vmatpush1.msra.mxu0 %v216
    %237 = vmatprep.subr.mxu0 0.0
    %238 = vmatpush1.msra.mxu0 %v215
    %239 = vmatprep.subr.mxu0 0.0
    %240 = vmatpush1.msra.mxu0 %v214
    %241 = vmatprep.subr.mxu0 0.0
    %242 = vmatpush1.msra.mxu0 %v213
    %243 = vmatprep.subr.mxu0 0.0
    %244 = vmatpush1.msra.mxu0 %v212
    %245 = vmatprep.subr.mxu0 0.0
    %246 = vmatpush1.msra.mxu0 %v211
    %247 = vmatprep.subr.mxu0 0.0
    %248 = vmatpush1.msra.mxu0 %v210
    %249 = vmatprep.subr.mxu0 0.0
    %250 = vmatpush1.msra.mxu0 %v209
    %251 = vmatprep.subr.mxu0 0.0
    %252 = vmatpush1.msra.mxu0 %v208
    %253 = vmatprep.subr.mxu0 0.0
    %254 = vmatpush1.msra.mxu0 %v207
    %255 = vmatprep.subr.mxu0 0.0
    %256 = vmatpush1.msra.mxu0 %v206
    %257 = vmatprep.subr.mxu0 0.0
    %258 = vmatpush1.msra.mxu0 %v205
    %259 = vmatprep.subr.mxu0 0.0
    %260 = vmatpush2.msra.mxu0 0.0
    %261 = vmatprep.subr.mxu0 0.0
    %262 = vmatpush2.msra.mxu0 0.0
    %263 = vmatprep.subr.mxu0 0.0
    %264 = vmatpush2.msra.mxu0 0.0
    %265 = vmatprep.subr.mxu0 0.0
    %266 = vmatpush2.msra.mxu0 0.0
    %267 = vmatprep.subr.mxu0 0.0
    %268 = vmatpush2.msra.mxu0 0.0
    %269 = vmatprep.subr.mxu0 0.0
    %270 = vmatpush2.msra.mxu0 0.0
    %271 = vmatprep.subr.mxu0 0.0
    %272 = vmatpush2.msra.mxu0 0.0
    %273 = vmatprep.subr.mxu0 0.0
    %274 = vmatpush2.msra.mxu0 0.0
    %275 = vmatprep.subr.mxu0 0.0
    %276 = vmatpush2.msra.mxu0 0.0
    %277 = vmatprep.subr.mxu0 0.0
    %278 = vmatpush2.msra.mxu0 0.0
    %279 = vmatprep.subr.mxu0 0.0
    %280 = vmatpush2.msra.mxu0 0.0
    %281 = vmatprep.subr.mxu0 0.0
    %282 = vmatpush2.msra.mxu0 0.0
    %283 = vmatprep.subr.mxu0 0.0
    %284 = vmatpush2.msra.mxu0 0.0
    %285 = vmatprep.subr.mxu0 0.0
    %286 = vmatpush2.msra.mxu0 0.0
    %287 = vmatprep.subr.mxu0 0.0
    %288 = vmatpush2.msra.mxu0 0.0
    %289 = vmatprep.subr.mxu0 0.0
    %290 = vmatpush2.msra.mxu0 0.0
    %291 = vmatprep.mubr.f32.mxu0 0.0
    %292 = vmatmul.mubr.f32.gmra.mxu0 %v222
    %v293 = vpop.f32.mrf.mxu0
    %v294 = vadd.f32 0.0, %v293
    %v295 = vpop.f32.mrf.mxu0
    %296 = vdwg.mxu0
    %vm297 = vcmask 254976
    %298 = vst.msk [vmem:[#allocation6] sm:$0x3] %vm297, %v294
    // Predicated region
    $region18: #{tpu_custom_call.1} parent=1 // pred_check
      _
    $region19: #{tpu_custom_call.1} parent=1 // pred_check_branch
      %300 = sbr.rel (0) target = $region21
    $region20: #{tpu_custom_call.1} parent=1 // pred_region
      %s302 = ssub.s32 32, 32
      %303 = vsyncadd [#allocation5], %s302
      %s305 = sshll.u32 [#allocation6], 4
      %s306 = int_to_ptr.vmem [resolvable:$true] %s305
      %308 = dma.vmem_to_hbm [thread:$0]  %s306, 32, %s3, [#allocation5]
    $region21: #{tpu_custom_call.1} parent=1 // pred_fallthru
      _
    // Predicated region
    $region22: #{tpu_custom_call.1} parent=1 // pred_check
      _
    $region23: #{tpu_custom_call.1} parent=1 // pred_check_branch
      %310 = sbr.rel (0) target = $region25
    $region24: #{tpu_custom_call.1} parent=1 // pred_region
      %311 = dma.done [#allocation5], 32
    $region25: #{tpu_custom_call.1} parent=1 // pred_fallthru
      _
    %312 = vsyncpa [#allocation4], 1
    %313 = vsyncpa [#allocation5], 1

</llo_original>
